<compile_context>
chip_gen: v7x
topology: tpu7x:2x2x1
jax: 0.10.0
libtpu: 0.0.40
codegen_flags: <defaults>
</compile_context>

<pallas_src>
import functools

import jax
import jax.numpy as jnp
from jax import lax
from jax.experimental import pallas as pl
from jax.experimental.pallas import tpu as pltpu

LANE = 128                      # lane width (last dim of every tile)
SUB = 8                         # sublane rows per inner-loop step (one f32 vreg row-block)
TM_TARGET = 512                 # preferred sublane rows per grid step (big tiles -> HBM roofline)
VMEM_INPUT_BUDGET = 24 << 20    # bytes for double-buffered input blocks (fits v5e/v6e/v7x)


def _dice_count_kernel(x_ref, t_ref, out_ref, *, num_classes, tm, valid_rows, needs_mask):
    """Accumulate per-class intersection / target counts for one batch element.

    x_ref:   (C, tm, 128) f32 logits tile
    t_ref:   (tm, 128)    i32 labels tile
    out_ref: (2*(C-1), SUB, 128) i32 -- rows [0, C-1): intersection counts,
             rows [C-1, 2*(C-1)): target counts.  Resident across the tile axis.
    """
    C = num_classes
    cm1 = C - 1
    i = pl.program_id(1)

    @pl.when(i == 0)
    def _init():
        out_ref[...] = jnp.zeros_like(out_ref)

    def chunk_counts(r0, rows):
        # Incremental first-max-wins argmax over channels: only one channel slab
        # plus (m, idx) live at a time (low vreg pressure even for large C).
        m = x_ref[0, pl.ds(r0, rows), :]
        idx = jnp.zeros((rows, LANE), jnp.int32)
        for c in range(1, C):
            xc = x_ref[c, pl.ds(r0, rows), :]
            idx = jnp.where(xc > m, jnp.int32(c), idx)
            m = jnp.maximum(m, xc)

        t = t_ref[pl.ds(r0, rows), :]
        if needs_mask:
            # Rows past the valid extent (partial boundary block) -> label -1,
            # which never matches a foreground class.
            row = i * tm + r0 + lax.broadcasted_iota(jnp.int32, (rows, LANE), 0)
            t = jnp.where(row < valid_rows, t, jnp.int32(-1))

        eq = idx == t
        inters, tsums = [], []
        for c in range(1, C):
            tc = t == c
            inters.append(jnp.logical_and(eq, tc).astype(jnp.int32))
            tsums.append(tc.astype(jnp.int32))
        return inters + tsums

    n_full = tm // SUB
    rem = tm - n_full * SUB

    if n_full > 0:
        def body(j, carry):
            r0 = pl.multiple_of(j * SUB, SUB)
            inc = chunk_counts(r0, SUB)
            return tuple(a + b for a, b in zip(carry, inc))

        init = tuple(jnp.zeros((SUB, LANE), jnp.int32) for _ in range(2 * cm1))
        acc = lax.fori_loop(0, n_full, body, init, unroll=min(8, n_full))
        for k in range(2 * cm1):
            out_ref[k] += acc[k]

    if rem > 0:
        # Static tail (only when tm == M and M is not a multiple of SUB).
        inc = chunk_counts(n_full * SUB, rem)
        for k in range(2 * cm1):
            out_ref[k, 0:rem, :] += inc[k]


def dice_loss(logits, target, eps=1e-8):
    """logits: (B, C, H, W) float (NCHW).  target: (B, H, W) integer labels.

    Returns a (1,) float32 array: [1 - mean_c dice_c], matching the PyTorch module.
    """
    B, C, H, W = logits.shape
    assert C >= 2, "DiceLoss needs at least 2 classes (class 0 is background)"
    HW = H * W

    x = logits.astype(jnp.float32).reshape(B, C, HW)
    t = target.astype(jnp.int32).reshape(B, HW)

    lane_pad = (-HW) % LANE
    if lane_pad:
        # Rare fallback (H*W not a multiple of 128): minimal pad so the free reshape works.
        x = jnp.pad(x, ((0, 0), (0, 0), (0, lane_pad)))
        t = jnp.pad(t, ((0, 0), (0, lane_pad)), constant_values=-1)
    M = (HW + lane_pad) // LANE

    x4 = x.reshape(B, C, M, LANE)      # free reshape, native layout preserved
    t3 = t.reshape(B, M, LANE)

    # Rows per grid step: as large as the (conservative, v7x-safe) VMEM budget allows.
    row_bytes = (C + 1) * LANE * 4                        # logits + target bytes per row
    cap = max(SUB, (VMEM_INPUT_BUDGET // (2 * row_bytes)) // SUB * SUB)
    if M <= min(TM_TARGET, cap):
        tm = M                                            # whole axis in one block
    else:
        tm = min(TM_TARGET, cap)                          # multiple of SUB
    num_tiles = -(-M // tm)
    needs_mask = (M % tm) != 0

    cm1 = C - 1
    kernel = functools.partial(
        _dice_count_kernel, num_classes=C, tm=tm, valid_rows=M, needs_mask=needs_mask)

    in_block_bytes = 2 * (C + 1) * tm * LANE * 4          # double-buffered input blocks
    vmem_limit = int(min(48 << 20, max(16 << 20, in_block_bytes + (6 << 20))))

    counts = pl.pallas_call(
        kernel,
        out_shape=jax.ShapeDtypeStruct((B, 2 * cm1, SUB, LANE), jnp.int32),
        grid_spec=pltpu.PrefetchScalarGridSpec(
            num_scalar_prefetch=0,
            grid=(B, num_tiles),
            in_specs=[
                pl.BlockSpec((pl.Squeezed(), C, tm, LANE), lambda b, i: (b, 0, i, 0)),
                pl.BlockSpec((pl.Squeezed(), tm, LANE), lambda b, i: (b, i, 0)),
            ],
            out_specs=pl.BlockSpec((pl.Squeezed(), 2 * cm1, SUB, LANE),
                                   lambda b, i: (b, 0, 0, 0)),
        ),
        compiler_params=pltpu.CompilerParams(
            dimension_semantics=("parallel", "arbitrary"),
            vmem_limit_bytes=vmem_limit,
        ),
    )(x4, t3)

    # Tiny epilogue in plain JAX: exact int32 totals -> dice -> loss.
    sums = jnp.sum(counts, axis=(0, 2, 3)).astype(jnp.float32)   # (2*(C-1),)
    inter, tsum = sums[:cm1], sums[cm1:]
    dice = (2.0 * inter + eps) / (inter + tsum + eps)
    return (1.0 - jnp.mean(dice)).reshape(1).astype(jnp.float32)


def dice_loss_ref(logits, target, eps=1e-8):
    """Pure-JAX reference mirroring the PyTorch forward."""
    B, C, H, W = logits.shape
    idx = jnp.argmax(logits, axis=1)
    dices = []
    for c in range(1, C):
        ti = target == c
        ii = idx == c
        inter = jnp.sum(jnp.logical_and(ti, ii)).astype(jnp.float32)
        tsum = jnp.sum(ti).astype(jnp.float32)
        dices.append((2.0 * inter + eps) / (inter + tsum + eps))
    return (1.0 - jnp.mean(jnp.stack(dices))).reshape(1)


if __name__ == "__main__":
    key = jax.random.PRNGKey(0)

    def check(B, C, H, W, k):
        k1, k2 = jax.random.split(k)
        logits = jax.random.normal(k1, (B, C, H, W), dtype=jnp.float32)
        target = jax.random.randint(k2, (B, H, W), 0, C, dtype=jnp.int32)
        out = jax.block_until_ready(jax.jit(dice_loss)(logits, target))
        ref = dice_loss_ref(logits, target)
        assert out.shape == (1,) and out.dtype == jnp.float32
        assert jnp.allclose(out, ref, atol=1e-5, rtol=1e-5), (B, C, H, W, out, ref)
        return out

    keys = jax.random.split(key, 3)
    check(2, 4, 16, 16, keys[0])     # primary small case (M < SUB: static-tail path)
    check(2, 5, 64, 64, keys[1])     # fori_loop fast path (M a multiple of SUB)
    check(3, 4, 272, 272, keys[2])   # M > TM_TARGET: multi-tile + boundary row masking

    print("KERNEL_OK")
</pallas_src>

<mosaic_0001>
module attributes {stable_mosaic.version = 11 : i64} {
  func.func @_dice_count_kernel(%arg0: i32, %arg1: i32, %arg2: memref<1x4x2x128xf32, #tpu.memory_space<vmem>>, %arg3: memref<1x2x128xi32, #tpu.memory_space<vmem>>, %arg4: memref<1x6x8x128xi32, #tpu.memory_space<vmem>>) attributes {dimension_semantics = [#tpu.dimension_semantics<parallel>, #tpu.dimension_semantics<arbitrary>], iteration_bounds = array<i64: 2, 1>, scalar_prefetch = 0 : i64, scratch_operands = 0 : i64, tpu.core_type = #tpu.core_type<tc>, window_params = [{transform_indices = @transform_0, window_bounds = array<i64: 1, 4, 2, 128>}, {transform_indices = @transform_1, window_bounds = array<i64: 1, 2, 128>}, {transform_indices = @transform_2, window_bounds = array<i64: 1, 6, 8, 128>}]} {
    %c0_i32 = arith.constant 0 : i32
    %0 = arith.cmpi eq, %arg1, %c0_i32 : i32
    %1 = arith.extui %0 : i1 to i32
    %c0_i32_0 = arith.constant 0 : i32
    %2 = arith.cmpi ne, %1, %c0_i32_0 : i32
    scf.if %2 {
      %c0_i32_66 = arith.constant 0 : i32
      %77 = vector.broadcast %c0_i32_66 : i32 to vector<6x8x128xi32>
      %c0_67 = arith.constant 0 : index
      %c0_68 = arith.constant 0 : index
      %c0_69 = arith.constant 0 : index
      %c0_70 = arith.constant 0 : index
      %78 = vector.load %arg4[%c0_67, %c0_68, %c0_69, %c0_70] : memref<1x6x8x128xi32, #tpu.memory_space<vmem>>, vector<1x6x8x128xi32>
      %79 = vector.shape_cast %78 : vector<1x6x8x128xi32> to vector<6x8x128xi32>
      %80 = vector.shape_cast %77 : vector<6x8x128xi32> to vector<1x6x8x128xi32>
      tpu.vector_store %arg4[%c0_67, %c0_68, %c0_69, %c0_70], %80 {strides = array<i32>} : memref<1x6x8x128xi32, #tpu.memory_space<vmem>>, vector<1x6x8x128xi32>,
    } else {
    }
    %c0 = arith.constant 0 : index
    %c0_1 = arith.constant 0 : index
    %c0_2 = arith.constant 0 : index
    %c0_3 = arith.constant 0 : index
    %3 = vector.load %arg2[%c0, %c0_1, %c0_2, %c0_3] : memref<1x4x2x128xf32, #tpu.memory_space<vmem>>, vector<1x1x2x128xf32>
    %4 = vector.shape_cast %3 : vector<1x1x2x128xf32> to vector<2x128xf32>
    %c0_i32_4 = arith.constant 0 : i32
    %5 = vector.broadcast %c0_i32_4 : i32 to vector<2x128xi32>
    %c0_5 = arith.constant 0 : index
    %c1 = arith.constant 1 : index
    %c0_6 = arith.constant 0 : index
    %c0_7 = arith.constant 0 : index
    %6 = vector.load %arg2[%c0_5, %c1, %c0_6, %c0_7] : memref<1x4x2x128xf32, #tpu.memory_space<vmem>>, vector<1x1x2x128xf32>
    %7 = vector.shape_cast %6 : vector<1x1x2x128xf32> to vector<2x128xf32>
    %8 = arith.cmpf ogt, %7, %4 : vector<2x128xf32>
    %c1_i32 = arith.constant 1 : i32
    %9 = vector.broadcast %c1_i32 : i32 to vector<2x128xi32>
    %10 = arith.select %8, %9, %5 : vector<2x128xi1>, vector<2x128xi32>
    %11 = arith.maximumf %4, %7 : vector<2x128xf32>
    %c0_8 = arith.constant 0 : index
    %c2 = arith.constant 2 : index
    %c0_9 = arith.constant 0 : index
    %c0_10 = arith.constant 0 : index
    %12 = vector.load %arg2[%c0_8, %c2, %c0_9, %c0_10] : memref<1x4x2x128xf32, #tpu.memory_space<vmem>>, vector<1x1x2x128xf32>
    %13 = vector.shape_cast %12 : vector<1x1x2x128xf32> to vector<2x128xf32>
    %14 = arith.cmpf ogt, %13, %11 : vector<2x128xf32>
    %c2_i32 = arith.constant 2 : i32
    %15 = vector.broadcast %c2_i32 : i32 to vector<2x128xi32>
    %16 = arith.select %14, %15, %10 : vector<2x128xi1>, vector<2x128xi32>
    %17 = arith.maximumf %11, %13 : vector<2x128xf32>
    %c0_11 = arith.constant 0 : index
    %c3 = arith.constant 3 : index
    %c0_12 = arith.constant 0 : index
    %c0_13 = arith.constant 0 : index
    %18 = vector.load %arg2[%c0_11, %c3, %c0_12, %c0_13] : memref<1x4x2x128xf32, #tpu.memory_space<vmem>>, vector<1x1x2x128xf32>
    %19 = vector.shape_cast %18 : vector<1x1x2x128xf32> to vector<2x128xf32>
    %20 = arith.cmpf ogt, %19, %17 : vector<2x128xf32>
    %c3_i32 = arith.constant 3 : i32
    %21 = vector.broadcast %c3_i32 : i32 to vector<2x128xi32>
    %22 = arith.select %20, %21, %16 : vector<2x128xi1>, vector<2x128xi32>
    %c0_14 = arith.constant 0 : index
    %c0_15 = arith.constant 0 : index
    %c0_16 = arith.constant 0 : index
    %23 = vector.load %arg3[%c0_14, %c0_15, %c0_16] : memref<1x2x128xi32, #tpu.memory_space<vmem>>, vector<1x2x128xi32>
    %24 = vector.shape_cast %23 : vector<1x2x128xi32> to vector<2x128xi32>
    %25 = arith.cmpi eq, %22, %24 : vector<2x128xi32>
    %c1_i32_17 = arith.constant 1 : i32
    %26 = vector.broadcast %c1_i32_17 : i32 to vector<2x128xi32>
    %27 = arith.cmpi eq, %24, %26 : vector<2x128xi32>
    %28 = arith.andi %25, %27 : vector<2x128xi1>
    %29 = arith.extui %28 : vector<2x128xi1> to vector<2x128xi32>
    %30 = arith.extui %27 : vector<2x128xi1> to vector<2x128xi32>
    %c2_i32_18 = arith.constant 2 : i32
    %31 = vector.broadcast %c2_i32_18 : i32 to vector<2x128xi32>
    %32 = arith.cmpi eq, %24, %31 : vector<2x128xi32>
    %33 = arith.andi %25, %32 : vector<2x128xi1>
    %34 = arith.extui %33 : vector<2x128xi1> to vector<2x128xi32>
    %35 = arith.extui %32 : vector<2x128xi1> to vector<2x128xi32>
    %c3_i32_19 = arith.constant 3 : i32
    %36 = vector.broadcast %c3_i32_19 : i32 to vector<2x128xi32>
    %37 = arith.cmpi eq, %24, %36 : vector<2x128xi32>
    %38 = arith.andi %25, %37 : vector<2x128xi1>
    %39 = arith.extui %38 : vector<2x128xi1> to vector<2x128xi32>
    %40 = arith.extui %37 : vector<2x128xi1> to vector<2x128xi32>
    %c0_20 = arith.constant 0 : index
    %c0_21 = arith.constant 0 : index
    %c0_22 = arith.constant 0 : index
    %c0_23 = arith.constant 0 : index
    %41 = vector.load %arg4[%c0_20, %c0_21, %c0_22, %c0_23] : memref<1x6x8x128xi32, #tpu.memory_space<vmem>>, vector<1x1x2x128xi32>
    %42 = vector.shape_cast %41 : vector<1x1x2x128xi32> to vector<2x128xi32>
    %43 = arith.addi %42, %29 : vector<2x128xi32>
    %c0_24 = arith.constant 0 : index
    %c0_25 = arith.constant 0 : index
    %c0_26 = arith.constant 0 : index
    %c0_27 = arith.constant 0 : index
    %44 = vector.load %arg4[%c0_24, %c0_25, %c0_26, %c0_27] : memref<1x6x8x128xi32, #tpu.memory_space<vmem>>, vector<1x1x2x128xi32>
    %45 = vector.shape_cast %44 : vector<1x1x2x128xi32> to vector<2x128xi32>
    %46 = vector.shape_cast %43 : vector<2x128xi32> to vector<1x1x2x128xi32>
    tpu.vector_store %arg4[%c0_24, %c0_25, %c0_26, %c0_27], %46 {strides = array<i32>} : memref<1x6x8x128xi32, #tpu.memory_space<vmem>>, vector<1x1x2x128xi32>,
    %c0_28 = arith.constant 0 : index
    %c1_29 = arith.constant 1 : index
    %c0_30 = arith.constant 0 : index
    %c0_31 = arith.constant 0 : index
    %47 = vector.load %arg4[%c0_28, %c1_29, %c0_30, %c0_31] : memref<1x6x8x128xi32, #tpu.memory_space<vmem>>, vector<1x1x2x128xi32>
    %48 = vector.shape_cast %47 : vector<1x1x2x128xi32> to vector<2x128xi32>
    %49 = arith.addi %48, %34 : vector<2x128xi32>
    %c0_32 = arith.constant 0 : index
    %c1_33 = arith.constant 1 : index
    %c0_34 = arith.constant 0 : index
    %c0_35 = arith.constant 0 : index
    %50 = vector.load %arg4[%c0_32, %c1_33, %c0_34, %c0_35] : memref<1x6x8x128xi32, #tpu.memory_space<vmem>>, vector<1x1x2x128xi32>
    %51 = vector.shape_cast %50 : vector<1x1x2x128xi32> to vector<2x128xi32>
    %52 = vector.shape_cast %49 : vector<2x128xi32> to vector<1x1x2x128xi32>
    tpu.vector_store %arg4[%c0_32, %c1_33, %c0_34, %c0_35], %52 {strides = array<i32>} : memref<1x6x8x128xi32, #tpu.memory_space<vmem>>, vector<1x1x2x128xi32>,
    %c0_36 = arith.constant 0 : index
    %c2_37 = arith.constant 2 : index
    %c0_38 = arith.constant 0 : index
    %c0_39 = arith.constant 0 : index
    %53 = vector.load %arg4[%c0_36, %c2_37, %c0_38, %c0_39] : memref<1x6x8x128xi32, #tpu.memory_space<vmem>>, vector<1x1x2x128xi32>
    %54 = vector.shape_cast %53 : vector<1x1x2x128xi32> to vector<2x128xi32>
    %55 = arith.addi %54, %39 : vector<2x128xi32>
    %c0_40 = arith.constant 0 : index
    %c2_41 = arith.constant 2 : index
    %c0_42 = arith.constant 0 : index
    %c0_43 = arith.constant 0 : index
    %56 = vector.load %arg4[%c0_40, %c2_41, %c0_42, %c0_43] : memref<1x6x8x128xi32, #tpu.memory_space<vmem>>, vector<1x1x2x128xi32>
    %57 = vector.shape_cast %56 : vector<1x1x2x128xi32> to vector<2x128xi32>
    %58 = vector.shape_cast %55 : vector<2x128xi32> to vector<1x1x2x128xi32>
    tpu.vector_store %arg4[%c0_40, %c2_41, %c0_42, %c0_43], %58 {strides = array<i32>} : memref<1x6x8x128xi32, #tpu.memory_space<vmem>>, vector<1x1x2x128xi32>,
    %c0_44 = arith.constant 0 : index
    %c3_45 = arith.constant 3 : index
    %c0_46 = arith.constant 0 : index
    %c0_47 = arith.constant 0 : index
    %59 = vector.load %arg4[%c0_44, %c3_45, %c0_46, %c0_47] : memref<1x6x8x128xi32, #tpu.memory_space<vmem>>, vector<1x1x2x128xi32>
    %60 = vector.shape_cast %59 : vector<1x1x2x128xi32> to vector<2x128xi32>
    %61 = arith.addi %60, %30 : vector<2x128xi32>
    %c0_48 = arith.constant 0 : index
    %c3_49 = arith.constant 3 : index
    %c0_50 = arith.constant 0 : index
    %c0_51 = arith.constant 0 : index
    %62 = vector.load %arg4[%c0_48, %c3_49, %c0_50, %c0_51] : memref<1x6x8x128xi32, #tpu.memory_space<vmem>>, vector<1x1x2x128xi32>
    %63 = vector.shape_cast %62 : vector<1x1x2x128xi32> to vector<2x128xi32>
    %64 = vector.shape_cast %61 : vector<2x128xi32> to vector<1x1x2x128xi32>
    tpu.vector_store %arg4[%c0_48, %c3_49, %c0_50, %c0_51], %64 {strides = array<i32>} : memref<1x6x8x128xi32, #tpu.memory_space<vmem>>, vector<1x1x2x128xi32>,
    %c0_52 = arith.constant 0 : index
    %c4 = arith.constant 4 : index
    %c0_53 = arith.constant 0 : index
    %c0_54 = arith.constant 0 : index
    %65 = vector.load %arg4[%c0_52, %c4, %c0_53, %c0_54] : memref<1x6x8x128xi32, #tpu.memory_space<vmem>>, vector<1x1x2x128xi32>
    %66 = vector.shape_cast %65 : vector<1x1x2x128xi32> to vector<2x128xi32>
    %67 = arith.addi %66, %35 : vector<2x128xi32>
    %c0_55 = arith.constant 0 : index
    %c4_56 = arith.constant 4 : index
    %c0_57 = arith.constant 0 : index
    %c0_58 = arith.constant 0 : index
    %68 = vector.load %arg4[%c0_55, %c4_56, %c0_57, %c0_58] : memref<1x6x8x128xi32, #tpu.memory_space<vmem>>, vector<1x1x2x128xi32>
    %69 = vector.shape_cast %68 : vector<1x1x2x128xi32> to vector<2x128xi32>
    %70 = vector.shape_cast %67 : vector<2x128xi32> to vector<1x1x2x128xi32>
    tpu.vector_store %arg4[%c0_55, %c4_56, %c0_57, %c0_58], %70 {strides = array<i32>} : memref<1x6x8x128xi32, #tpu.memory_space<vmem>>, vector<1x1x2x128xi32>,
    %c0_59 = arith.constant 0 : index
    %c5 = arith.constant 5 : index
    %c0_60 = arith.constant 0 : index
    %c0_61 = arith.constant 0 : index
    %71 = vector.load %arg4[%c0_59, %c5, %c0_60, %c0_61] : memref<1x6x8x128xi32, #tpu.memory_space<vmem>>, vector<1x1x2x128xi32>
    %72 = vector.shape_cast %71 : vector<1x1x2x128xi32> to vector<2x128xi32>
    %73 = arith.addi %72, %40 : vector<2x128xi32>
    %c0_62 = arith.constant 0 : index
    %c5_63 = arith.constant 5 : index
    %c0_64 = arith.constant 0 : index
    %c0_65 = arith.constant 0 : index
    %74 = vector.load %arg4[%c0_62, %c5_63, %c0_64, %c0_65] : memref<1x6x8x128xi32, #tpu.memory_space<vmem>>, vector<1x1x2x128xi32>
    %75 = vector.shape_cast %74 : vector<1x1x2x128xi32> to vector<2x128xi32>
    %76 = vector.shape_cast %73 : vector<2x128xi32> to vector<1x1x2x128xi32>
    tpu.vector_store %arg4[%c0_62, %c5_63, %c0_64, %c0_65], %76 {strides = array<i32>} : memref<1x6x8x128xi32, #tpu.memory_space<vmem>>, vector<1x1x2x128xi32>,
    return
  }
  func.func @transform_0(%arg0: i32, %arg1: i32) -> (i32, i32, i32, i32) {
    %c0_i32 = arith.constant 0 : i32
    %c0_i32_0 = arith.constant 0 : i32
    %c0_i32_1 = arith.constant 0 : i32
    return %arg0, %c0_i32, %arg1, %c0_i32_0 : i32, i32, i32, i32
  }
  func.func @transform_1(%arg0: i32, %arg1: i32) -> (i32, i32, i32) {
    %c0_i32 = arith.constant 0 : i32
    %c0_i32_0 = arith.constant 0 : i32
    return %arg0, %arg1, %c0_i32 : i32, i32, i32
  }
  func.func @transform_2(%arg0: i32, %arg1: i32) -> (i32, i32, i32, i32) {
    %c0_i32 = arith.constant 0 : i32
    %c0_i32_0 = arith.constant 0 : i32
    %c0_i32_1 = arith.constant 0 : i32
    %c0_i32_2 = arith.constant 0 : i32
    return %arg0, %c0_i32, %c0_i32_0, %c0_i32_1 : i32, i32, i32, i32
  }
}

</mosaic_0001>

<llo_original>
// kernel: dice_loss.1
$region0: #{dice_loss.1}
  #allocation0 [shape = 'u32[]', space=smem, size = 0x4, offset = 0x4, fixed_abs, tag = 'smem constant byte address 0x4 - core index']
  #allocation1 [shape = 'u32[144,128]{1,0:T(1,128)}', space=vmem, size = 0x12000, scoped, tag = 'internal scratch']
  %s0 = inlined_call_operand.vmem [shape: f32[2,4,2,128], index: 0, kind: input, shape index: {}]
  %s1 = inlined_call_operand.vmem [shape: s32[2,2,128], index: 1, kind: input, shape index: {}]
  %s2 = inlined_call_operand.vmem [shape: s32[2,6,8,128], index: 2, kind: output, shape index: {}]
  %s3 = sld [smem:[#allocation0]]
  $region45: #{dice_loss.1} parent=0
    _
  %s5 = ssub.s32 1, %s3
  %s6 = scalar_select 0, %s5, %s3
  loop: start=0, step=1, limit=4
  $region2: #{dice_loss.1} parent=0 // loop_pre_header
    _
  $region3: #{dice_loss.1} parent=0 // loop_header
    %s8 = sphi 0, %s12
    %p9 = scmp.ge.s32.totalorder %s8, 4
    %s15 = sphi 0, %s27
    %s16 = sphi 0, %s23
    %s17 = sphi 0, %s15
    %s18 = sphi 0, %s16
    %s19 = sphi 0, %s17
    %s20 = sphi 0, %s18
    %s32 = sphi 0, %s34
    %s35 = sphi 0, %s32
    %s36 = sphi 0, %s35
    %s52 = sphi 0, %s36
    %s60 = sphi 0, %s62
    %s63 = sphi 0, %s60
    %s64 = sphi 0, %s63
    %s80 = sphi 0, %s64
    %s86 = sphi 0, %s88
    %s89 = sphi 0, %s86
    %s90 = sphi 0, %s89
    %s106 = sphi 0, %s90
  $region4: #{dice_loss.1} parent=0 // loop_header_branch
    %11 = sbr.rel (%p9) target = $region8
  $region5: #{dice_loss.1} parent=0 // loop_body
    %s13 = ssub.s32 %s8, 1
    %s14 = ssub.s32 %s8, 2
    %s21 = sadd.s32 1, %s16
    %p22 = scmp.ge.s32.totalorder %s21, 1
    %s23 = scalar_select %p22, 0, %s21
    %s24 = sadd.s32 1, %s15
    %s25 = scalar_select %p22, %s24, %s15
    %p26 = scmp.ge.s32.totalorder %s25, 2
    %s27 = scalar_select %p26, 0, %s25
    %s28 = ssub.s32 %s15, %s27
    %s29 = ssub.s32 %s16, %s23
    %s30 = sor.u32 %s28, %s29
    %p31 = scmp.eq.s32.totalorder %s30, 0
    %s33 = sadd.s32 %s32, 1
    %s34 = scalar_select %p31, %s32, %s33
    %p37 = pneg %p31
    %p38 = scmp.eq.s32.totalorder %s8, 1
    %p39 = por %p37, %p38
    %p40 = scmp.ne.s32.totalorder %s32, %s35
    %p41 = scmp.eq.s32.totalorder %s8, 0
    %p42 = por %p40, %p41
    %p43 = scmp.ne.s32.totalorder %s32, %s35
    %p44 = scmp.eq.s32.totalorder %s13, 1
    %p45 = por %p43, %p44
    %p46 = scmp.ne.s32.totalorder %s35, %s36
    %p47 = scmp.eq.s32.totalorder %s13, 0
    %p48 = por %p46, %p47
    %p49 = scmp.ne.s32.totalorder %s35, %s36
    %p50 = scmp.eq.s32.totalorder %s14, 1
    %p51 = por %p49, %p50
    %p53 = scmp.ne.s32.totalorder %s36, %s52
    %p54 = scmp.eq.s32.totalorder %s14, 0
    %p55 = por %p53, %p54
    %s56 = ssub.s32 %s15, %s27
    %s57 = ssub.s32 %s16, %s23
    %s58 = sor.u32 %s56, %s57
    %p59 = scmp.eq.s32.totalorder %s58, 0
    %s61 = sadd.s32 %s60, 1
    %s62 = scalar_select %p59, %s60, %s61
    %p65 = pneg %p59
    %p66 = scmp.eq.s32.totalorder %s8, 1
    %p67 = por %p65, %p66
    %p68 = scmp.ne.s32.totalorder %s60, %s63
    %p69 = scmp.eq.s32.totalorder %s8, 0
    %p70 = por %p68, %p69
    %p71 = scmp.ne.s32.totalorder %s60, %s63
    %p72 = scmp.eq.s32.totalorder %s13, 1
    %p73 = por %p71, %p72
    %p74 = scmp.ne.s32.totalorder %s63, %s64
    %p75 = scmp.eq.s32.totalorder %s13, 0
    %p76 = por %p74, %p75
    %p77 = scmp.ne.s32.totalorder %s63, %s64
    %p78 = scmp.eq.s32.totalorder %s14, 1
    %p79 = por %p77, %p78
    %p81 = scmp.ne.s32.totalorder %s64, %s80
    %p82 = scmp.eq.s32.totalorder %s14, 0
    %p83 = por %p81, %p82
    %s84 = ssub.s32 %s15, %s27
    %p85 = scmp.eq.s32.totalorder %s84, 0
    %s87 = sadd.s32 %s86, 1
    %s88 = scalar_select %p85, %s86, %s87
    %p91 = pneg %p85
    %p92 = scmp.eq.s32.totalorder %s8, 1
    %p93 = por %p91, %p92
    %p94 = scmp.ne.s32.totalorder %s86, %s89
    %p95 = scmp.eq.s32.totalorder %s8, 0
    %p96 = por %p94, %p95
    %p97 = scmp.ne.s32.totalorder %s86, %s89
    %p98 = scmp.eq.s32.totalorder %s13, 1
    %p99 = por %p97, %p98
    %p100 = scmp.ne.s32.totalorder %s89, %s90
    %p101 = scmp.eq.s32.totalorder %s13, 0
    %p102 = por %p100, %p101
    %p103 = scmp.ne.s32.totalorder %s89, %s90
    %p104 = scmp.eq.s32.totalorder %s14, 1
    %p105 = por %p103, %p104
    %p107 = scmp.ne.s32.totalorder %s90, %s106
    %p108 = scmp.eq.s32.totalorder %s14, 0
    %p109 = por %p107, %p108
    %p110 = scmp.le.s32.totalorder 1, %s8
    %p111 = scmp.lt.s32.totalorder %s8, 3
    %p112 = pnand %p110, %p111
    %p113 = pneg %p112
    // Predicated region
    $region9: #{dice_loss.1} parent=5 // pred_check
      _
    $region10: #{dice_loss.1} parent=5 // pred_check_branch
      %115 = sbr.rel (%p112) target = $region12
    $region11: #{dice_loss.1} parent=5 // pred_region
      %s116 = ssub.s32 %s8, 1
    $region12: #{dice_loss.1} parent=5 // pred_fallthru
      _
    %p117 = scmp.lt.s32.totalorder %s8, 2
    // Predicated region
    $region13: #{dice_loss.1} parent=5 // pred_check
      %p118 = pneg %p117
    $region14: #{dice_loss.1} parent=5 // pred_check_branch
      %120 = sbr.rel (%p118) target = $region16
    $region15: #{dice_loss.1} parent=5 // pred_region
      // Predicated region
      $region17: #{dice_loss.1} parent=15 // pred_check
        %p121 = pneg %p42
      $region18: #{dice_loss.1} parent=15 // pred_check_branch
        %123 = sbr.rel (%p121) target = $region20
      $region19: #{dice_loss.1} parent=15 // pred_region
        %p124 = scmp.lt.s32.totalorder %s15, 1
        %s125 = scalar_select %p124, %s15, 1
        %p126 = scmp.lt.s32.totalorder %s16, 0
        %s127 = scalar_select %p126, %s16, 0
        %s128 = smul.addr %s125, 4
        %s129 = sadd.s32 %s127, %s128
        %s130 = smul.addr %s129, 2
        %s131 = scalar_lea.vmem %s0, %s130
      $region20: #{dice_loss.1} parent=15 // pred_fallthru
        _
      // Predicated region
      $region21: #{dice_loss.1} parent=15 // pred_check
        %p132 = pneg %p70
      $region22: #{dice_loss.1} parent=15 // pred_check_branch
        %134 = sbr.rel (%p132) target = $region24
      $region23: #{dice_loss.1} parent=15 // pred_region
        %p135 = scmp.lt.s32.totalorder %s15, 1
        %s136 = scalar_select %p135, %s15, 1
        %p137 = scmp.lt.s32.totalorder %s16, 0
        %s138 = scalar_select %p137, %s16, 0
        %s139 = sadd.s32 %s138, %s136
        %s140 = smul.addr %s139, 2
        %s141 = scalar_lea.vmem %s1, %s140
      $region24: #{dice_loss.1} parent=15 // pred_fallthru
        _
    $region16: #{dice_loss.1} parent=5 // pred_fallthru
      _
    %p142 = scmp.le.s32.totalorder 1, %s8
    %p143 = scmp.lt.s32.totalorder %s8, 3
    %p144 = pnand %p142, %p143
    %p145 = pneg %p144
    // Predicated region
    $region25: #{dice_loss.1} parent=5 // pred_check
      _
    $region26: #{dice_loss.1} parent=5 // pred_check_branch
      %147 = sbr.rel (%p144) target = $region28
    $region27: #{dice_loss.1} parent=5 // pred_region
      %s148 = ssub.s32 %s8, 1
      %p149 = scmp.lt.s32.totalorder %s17, 1
      %s150 = scalar_select %p149, %s17, 1
      %p151 = scmp.lt.s32.totalorder %s18, 0
      %s152 = scalar_select %p151, %s18, 0
      %s153 = smul.addr %s150, 4
      %s154 = sadd.s32 %s152, %s153
      %s155 = smul.addr %s154, 2
      %s156 = scalar_lea.vmem %s0, %s155
      %p157 = pneg %p48
      %p158 = pneg %p45
      %p159 = scmp.lt.s32.totalorder %s17, 1
      %s160 = scalar_select %p159, %s17, 1
      %p161 = scmp.lt.s32.totalorder %s18, 0
      %s162 = scalar_select %p161, %s18, 0
      %s163 = sadd.s32 %s162, %s160
      %s164 = smul.addr %s163, 2
      %s165 = scalar_lea.vmem %s1, %s164
      %p166 = pneg %p76
      %p167 = pneg %p73
      %p168 = pneg %p102
      %p169 = pneg %p99
      %p170 = scmp.lt.s32.totalorder %s17, 1
      %s171 = scalar_select %p170, %s17, 1
      %s172 = smul.addr %s171, 6
      %s173 = smul.addr %s172, 8
      %s174 = scalar_lea.vmem %s2, %s173
      %p175 = scmp.lt.s32.totalorder %s17, 1
      %s176 = scalar_select %p175, %s17, 1
      %p177 = scmp.lt.s32.totalorder %s18, 0
      %s178 = scalar_select %p177, %s18, 0
      %s179 = smul.addr %s176, 4
      %s180 = sadd.s32 %s178, %s179
      %s181 = smul.addr %s180, 2
      %s182 = scalar_lea.vmem %s0, %s181
      %p183 = scmp.lt.s32.totalorder %s17, 1
      %s184 = scalar_select %p183, %s17, 1
      %p185 = scmp.lt.s32.totalorder %s18, 0
      %s186 = scalar_select %p185, %s18, 0
      %s187 = sadd.s32 %s186, %s184
      %s188 = smul.addr %s187, 2
      %s189 = scalar_lea.vmem %s1, %s188
      %p190 = scmp.lt.s32.totalorder %s17, 1
      %s191 = scalar_select %p190, %s17, 1
      %s192 = smul.addr %s191, 6
      %s193 = smul.addr %s192, 8
      %s194 = scalar_lea.vmem %s2, %s193
      %p195 = scmp.eq.s32.totalorder %s18, 0
      // Predicated region
      $region29: #{dice_loss.1} parent=27 // pred_check
        %p196 = pneg %p195
      $region30: #{dice_loss.1} parent=27 // pred_check_branch
        %198 = sbr.rel (%p196) target = $region32
      $region31: #{dice_loss.1} parent=27 // pred_region
        %199 = vst [vmem:[%s194] sm:$0xff] 0
        %200 = vst [vmem:[%s194 + $0x8] sm:$0xff] 0
        %201 = vst [vmem:[%s194 + $0x10] sm:$0xff] 0
        %202 = vst [vmem:[%s194 + $0x18] sm:$0xff] 0
        %203 = vst [vmem:[%s194 + $0x20] sm:$0xff] 0
        %204 = vst [vmem:[%s194 + $0x28] sm:$0xff] 0
      $region32: #{dice_loss.1} parent=27 // pred_fallthru
        _
      %v205 = vld [vmem:[%s182] sm:$0x3]
      %s206 = scalar_lea.vmem %s182, 2
      %v207 = vld [vmem:[%s206] sm:$0x3]
      %vm208 = vcmp.gt.f32.partialorder %v207, %v205
      %v209 = vsel %vm208, 1, 0
      %v210 = vmax.f32 %v205, %v207
      %s211 = scalar_lea.vmem %s182, 4
      %v212 = vld [vmem:[%s211] sm:$0x3]
      %vm213 = vcmp.gt.f32.partialorder %v212, %v210
      %v214 = vsel %vm213, 2, %v209
      %v215 = vmax.f32 %v210, %v212
      %s216 = scalar_lea.vmem %s182, 6
      %v217 = vld [vmem:[%s216] sm:$0x3]
      %vm218 = vcmp.gt.f32.partialorder %v217, %v215
      %v219 = vsel %vm218, 3, %v214
      %v220 = vld [vmem:[%s189] sm:$0x3]
      %vm221 = vcmp.eq.s32.totalorder %v219, %v220
      %vm222 = vcmp.eq.s32.totalorder %v220, 1
      %vm223 = vmand %vm221, %vm222
      %v224 = vsel %vm223, 1, 0
      %v225 = vsel %vm222, 1, 0
      %vm226 = vcmp.eq.s32.totalorder %v220, 2
      %vm227 = vmand %vm221, %vm226
      %v228 = vsel %vm227, 1, 0
      %v229 = vsel %vm226, 1, 0
      %vm230 = vcmp.eq.s32.totalorder %v220, 3
      %vm231 = vmand %vm221, %vm230
      %v232 = vsel %vm231, 1, 0
      %v233 = vsel %vm230, 1, 0
      %v234 = vld [vmem:[%s194] sm:$0x3]
      %v235 = vadd.s32 %v234, %v224
      %236 = vst [vmem:[%s194] sm:$0x3] %v235
      %s237 = scalar_lea.vmem %s194, 8
      %v238 = vld [vmem:[%s237] sm:$0x3]
      %v239 = vadd.s32 %v238, %v228
      %240 = vst [vmem:[%s237] sm:$0x3] %v239
      %s241 = scalar_lea.vmem %s194, 16
      %v242 = vld [vmem:[%s241] sm:$0x3]
      %v243 = vadd.s32 %v242, %v232
      %244 = vst [vmem:[%s241] sm:$0x3] %v243
      %s245 = scalar_lea.vmem %s194, 24
      %v246 = vld [vmem:[%s245] sm:$0x3]
      %v247 = vadd.s32 %v246, %v225
      %248 = vst [vmem:[%s245] sm:$0x3] %v247
      %s249 = scalar_lea.vmem %s194, 32
      %v250 = vld [vmem:[%s249] sm:$0x3]
      %v251 = vadd.s32 %v250, %v229
      %252 = vst [vmem:[%s249] sm:$0x3] %v251
      %s253 = scalar_lea.vmem %s194, 40
      %v254 = vld [vmem:[%s253] sm:$0x3]
      %v255 = vadd.s32 %v254, %v233
      %256 = vst [vmem:[%s253] sm:$0x3] %v255
      %p257 = scmp.lt.s32.totalorder %s17, 1
      %s258 = scalar_select %p257, %s17, 1
      %s259 = smul.addr %s258, 6
      %s260 = smul.addr %s259, 8
      %s261 = scalar_lea.vmem %s2, %s260
      // Predicated region
      $region33: #{dice_loss.1} parent=27 // pred_check
        %p262 = pneg %p99
      $region34: #{dice_loss.1} parent=27 // pred_check_branch
        %264 = sbr.rel (%p262) target = $region36
      $region35: #{dice_loss.1} parent=27 // pred_region
        _
      $region36: #{dice_loss.1} parent=27 // pred_fallthru
        _
    $region28: #{dice_loss.1} parent=5 // pred_fallthru
      _
    %p265 = scmp.le.s32.totalorder 2, %s8
    // Predicated region
    $region37: #{dice_loss.1} parent=5 // pred_check
      %p266 = pneg %p265
    $region38: #{dice_loss.1} parent=5 // pred_check_branch
      %268 = sbr.rel (%p266) target = $region40
    $region39: #{dice_loss.1} parent=5 // pred_region
      %s269 = ssub.s32 %s8, 2
      // Predicated region
      $region41: #{dice_loss.1} parent=39 // pred_check
        %p270 = pneg %p105
      $region42: #{dice_loss.1} parent=39 // pred_check_branch
        %272 = sbr.rel (%p270) target = $region44
      $region43: #{dice_loss.1} parent=39 // pred_region
        %p273 = scmp.lt.s32.totalorder %s19, 1
        %s274 = scalar_select %p273, %s19, 1
        %s275 = smul.addr %s274, 6
        %s276 = smul.addr %s275, 8
        %s277 = scalar_lea.vmem %s2, %s276
      $region44: #{dice_loss.1} parent=39 // pred_fallthru
        _
    $region40: #{dice_loss.1} parent=5 // pred_fallthru
      _
  $region6: #{dice_loss.1} parent=0 // loop_footer
    %s12 = sadd.s32 1, %s8
  $region7: #{dice_loss.1} parent=0 // loop_footer_branch
    %7 = sbr.rel target = $region3
  $region8: #{dice_loss.1} parent=0 // loop_exit
    _

</llo_original>
